<compile_context>
chip_gen: v7x
topology: tpu7x:2x2x1
jax: 0.10.0
libtpu: 0.0.40
codegen_flags: <defaults>
</compile_context>

<pallas_src>
import jax
import jax.numpy as jnp
from jax.experimental import pallas as pl
from jax.experimental.pallas import tpu as pltpu

IMAGE_SIZE = 64
_MAX_IMGS_PER_STEP = 8  # VMEM + unroll budget cap for the per-step image block


def _bilinear_matrix(out_size: int, in_size: int) -> jnp.ndarray:
    """Interpolation matrix M (out_size, in_size) s.t. y = M @ x resizes x."""
    scale = in_size / out_size
    i = jnp.arange(out_size, dtype=jnp.float32)
    src = (i + 0.5) * scale - 0.5
    src = jnp.clip(src, 0.0, float(in_size - 1))
    i0 = jnp.floor(src).astype(jnp.int32)
    i1 = jnp.minimum(i0 + 1, in_size - 1)
    w1 = src - i0.astype(jnp.float32)
    w0 = 1.0 - w1
    rows = jnp.arange(out_size)
    m = jnp.zeros((out_size, in_size), dtype=jnp.float32)
    m = m.at[rows, i0].add(w0)
    m = m.at[rows, i1].add(w1)
    return m


def _pick_block_b(b: int) -> int:
    """Largest divisor of b that is <= _MAX_IMGS_PER_STEP."""
    bb = min(b, _MAX_IMGS_PER_STEP)
    while b % bb:
        bb -= 1
    return max(bb, 1)


def _resize_kernel(x_ref, wh_ref, wwt_ref, o_ref):
    # x_ref:   (BB, C, H_in, W_in) uint8  -- BB images, all channels
    # wh_ref:  (64, H_in)  bf16, pre-scaled by 1/255 (ToTensor folded in)
    # wwt_ref: (W_in, 64)  bf16           -- column interp matrix, transposed
    # o_ref:   (BB, C, 64, 64) f32
    bb, c, h, w = x_ref.shape
    n = o_ref.shape[-1]

    # u8 -> f32 -> bf16 inside the kernel (input DMA stays 1 byte/pixel).
    xf = x_ref[...].astype(jnp.float32)                    # (BB, C, H, W)
    xb = xf.reshape(bb * c * h, w).astype(jnp.bfloat16)    # (BB*C*H, W)

    # W-contraction as a single tall matmul on the MXU: (BB*C*H, W) @ (W, 64).
    t1 = jnp.dot(xb, wwt_ref[...], preferred_element_type=jnp.float32)
    t1 = t1.reshape(bb, c, h, n).astype(jnp.bfloat16)      # (BB, C, H, 64)

    wh = wh_ref[...]                                       # (64, H), /255 folded
    # H-contraction per (image, channel): BB*C is tiny & static -> unrolled.
    for bi in range(bb):
        for ci in range(c):
            o_ref[bi, ci] = jnp.dot(
                wh, t1[bi, ci], preferred_element_type=jnp.float32
            )


def image_transformations_batch(imgs_bhwc_u8: jnp.ndarray) -> jnp.ndarray:
    """Batched equivalent of ImageTransformations.forward.

    imgs_bhwc_u8: (B, H, W, C) uint8. Returns (B, C, 64, 64) float32 in [0, 1].
    """
    b, h, w, c = imgs_bhwc_u8.shape
    bb = _pick_block_b(b)

    # Glue: HWC -> CHW while still uint8 (no f32 copy of the image in HBM).
    x = jnp.transpose(imgs_bhwc_u8, (0, 3, 1, 2))          # (B, C, H, W) uint8

    # Constant interpolation matrices; ToTensor's 1/255 folded into wh.
    wh = (_bilinear_matrix(IMAGE_SIZE, h) * (1.0 / 255.0)).astype(jnp.bfloat16)
    wwt = _bilinear_matrix(IMAGE_SIZE, w).T.astype(jnp.bfloat16)

    return pl.pallas_call(
        _resize_kernel,
        out_shape=jax.ShapeDtypeStruct((b, c, IMAGE_SIZE, IMAGE_SIZE), jnp.float32),
        grid_spec=pltpu.PrefetchScalarGridSpec(
            num_scalar_prefetch=0,
            grid=(b // bb,),
            in_specs=[
                pl.BlockSpec((bb, c, h, w), lambda gi: (gi, 0, 0, 0)),
                pl.BlockSpec((IMAGE_SIZE, h), lambda gi: (0, 0)),
                pl.BlockSpec((w, IMAGE_SIZE), lambda gi: (0, 0)),
            ],
            out_specs=pl.BlockSpec(
                (bb, c, IMAGE_SIZE, IMAGE_SIZE), lambda gi: (gi, 0, 0, 0)
            ),
        ),
        compiler_params=pltpu.CompilerParams(
            dimension_semantics=("parallel",),
        ),
    )(x, wh, wwt)


def image_transformations(img_hwc_u8: jnp.ndarray) -> jnp.ndarray:
    """Single-image forward (matches the PyTorch module): (H, W, C) uint8 ->
    (C, 64, 64) float32 in [0, 1]."""
    return image_transformations_batch(img_hwc_u8[None])[0]


def _reference_batch(imgs_bhwc_u8: jnp.ndarray) -> jnp.ndarray:
    """Pure-JAX f32 reference (bilinear taps, antialias=False) for checking."""
    b, h, w, c = imgs_bhwc_u8.shape
    x = jnp.transpose(imgs_bhwc_u8, (0, 3, 1, 2)).astype(jnp.float32) / 255.0
    wh = _bilinear_matrix(IMAGE_SIZE, h)
    ww = _bilinear_matrix(IMAGE_SIZE, w)
    return jnp.einsum("mh,bchw,nw->bcmn", wh, x, ww)


if __name__ == "__main__":
    key = jax.random.PRNGKey(0)
    # Small synthetic "PIL-like" images: batch of 2, 96 x 80, 3 channels, uint8.
    B, H_IN, W_IN, C = 2, 96, 80, 3
    imgs = jax.random.randint(
        key, (B, H_IN, W_IN, C), 0, 256, dtype=jnp.int32
    ).astype(jnp.uint8)

    out = image_transformations_batch(imgs)
    out = jax.block_until_ready(out)

    assert out.shape == (B, C, IMAGE_SIZE, IMAGE_SIZE), out.shape
    assert out.dtype == jnp.float32

    ref = _reference_batch(imgs)
    max_err = float(jnp.max(jnp.abs(out - ref)))
    # bf16 matmul operands (f32 accumulation) => small deviation from the f32
    # reference; well under half a uint8 LSB in practice.
    assert max_err < 2e-2, f"max abs error {max_err}"
    assert float(jnp.min(out)) >= -1e-3 and float(jnp.max(out)) <= 1.0 + 2e-2

    # Single-image path (module semantics) agrees with the batched call.
    single = jax.block_until_ready(image_transformations(imgs[0]))
    assert single.shape == (C, IMAGE_SIZE, IMAGE_SIZE)
    assert float(jnp.max(jnp.abs(single - out[0]))) < 1e-6

    print("KERNEL_OK")
</pallas_src>

<mosaic_0001>
module attributes {stable_mosaic.version = 11 : i64} {
  func.func @_resize_kernel(%arg0: i32, %arg1: memref<2x3x96x80xi8, #tpu.memory_space<vmem>>, %arg2: memref<64x96xbf16, #tpu.memory_space<vmem>>, %arg3: memref<80x64xbf16, #tpu.memory_space<vmem>>, %arg4: memref<2x3x64x64xf32, #tpu.memory_space<vmem>>) attributes {dimension_semantics = [#tpu.dimension_semantics<parallel>], iteration_bounds = array<i64: 1>, scalar_prefetch = 0 : i64, scratch_operands = 0 : i64, tpu.core_type = #tpu.core_type<tc>, window_params = [{transform_indices = @transform_0, window_bounds = array<i64: 2, 3, 96, 80>}, {pipeline_mode = #tpu.pipeline_mode<synchronous>, transform_indices = @transform_1, window_bounds = array<i64: 64, 96>}, {pipeline_mode = #tpu.pipeline_mode<synchronous>, transform_indices = @transform_2, window_bounds = array<i64: 80, 64>}, {transform_indices = @transform_3, window_bounds = array<i64: 2, 3, 64, 64>}]} {
    %c0 = arith.constant 0 : index
    %c0_0 = arith.constant 0 : index
    %c0_1 = arith.constant 0 : index
    %c0_2 = arith.constant 0 : index
    %0 = vector.load %arg1[%c0, %c0_0, %c0_1, %c0_2] : memref<2x3x96x80xi8, #tpu.memory_space<vmem>>, vector<2x3x96x80xi8>
    %1 = arith.uitofp %0 : vector<2x3x96x80xi8> to vector<2x3x96x80xf32>
    %2 = vector.shape_cast %1 : vector<2x3x96x80xf32> to vector<576x80xf32>
    %3 = arith.truncf %2 : vector<576x80xf32> to vector<576x80xbf16>
    %c0_3 = arith.constant 0 : index
    %c0_4 = arith.constant 0 : index
    %4 = vector.load %arg3[%c0_3, %c0_4] : memref<80x64xbf16, #tpu.memory_space<vmem>>, vector<80x64xbf16>
    %cst = arith.constant dense<0.000000e+00> : vector<576x64xf32>
    %5 = tpu.matmul %3, %4, %cst {dimension_numbers = #tpu.dot_dimension_numbers<[1], [0], [0], [1], [0, 0, 1, 1], [], []>} : vector<576x80xbf16>, vector<80x64xbf16>, vector<576x64xf32> -> vector<576x64xf32>
    %6 = vector.shape_cast %5 : vector<576x64xf32> to vector<2x3x96x64xf32>
    %7 = arith.truncf %6 : vector<2x3x96x64xf32> to vector<2x3x96x64xbf16>
    %c0_5 = arith.constant 0 : index
    %c0_6 = arith.constant 0 : index
    %8 = vector.load %arg2[%c0_5, %c0_6] : memref<64x96xbf16, #tpu.memory_space<vmem>>, vector<64x96xbf16>
    %9 = vector.extract_strided_slice %7 {offsets = [0, 0, 0, 0], sizes = [1, 1, 96, 64], strides = [1, 1, 1, 1]} : vector<2x3x96x64xbf16> to vector<1x1x96x64xbf16>
    %10 = vector.shape_cast %9 : vector<1x1x96x64xbf16> to vector<96x64xbf16>
    %cst_7 = arith.constant dense<0.000000e+00> : vector<64x64xf32>
    %11 = tpu.matmul %8, %10, %cst_7 {dimension_numbers = #tpu.dot_dimension_numbers<[1], [0], [0], [1], [0, 0, 1, 1], [], []>} : vector<64x96xbf16>, vector<96x64xbf16>, vector<64x64xf32> -> vector<64x64xf32>
    %c0_8 = arith.constant 0 : index
    %c0_9 = arith.constant 0 : index
    %c0_10 = arith.constant 0 : index
    %c0_11 = arith.constant 0 : index
    %12 = vector.load %arg4[%c0_8, %c0_9, %c0_10, %c0_11] : memref<2x3x64x64xf32, #tpu.memory_space<vmem>>, vector<1x1x64x64xf32>
    %13 = vector.shape_cast %12 : vector<1x1x64x64xf32> to vector<64x64xf32>
    %14 = vector.shape_cast %11 : vector<64x64xf32> to vector<1x1x64x64xf32>
    tpu.vector_store %arg4[%c0_8, %c0_9, %c0_10, %c0_11], %14 {strides = array<i32>} : memref<2x3x64x64xf32, #tpu.memory_space<vmem>>, vector<1x1x64x64xf32>,
    %15 = vector.extract_strided_slice %7 {offsets = [0, 1, 0, 0], sizes = [1, 1, 96, 64], strides = [1, 1, 1, 1]} : vector<2x3x96x64xbf16> to vector<1x1x96x64xbf16>
    %16 = vector.shape_cast %15 : vector<1x1x96x64xbf16> to vector<96x64xbf16>
    %cst_12 = arith.constant dense<0.000000e+00> : vector<64x64xf32>
    %17 = tpu.matmul %8, %16, %cst_12 {dimension_numbers = #tpu.dot_dimension_numbers<[1], [0], [0], [1], [0, 0, 1, 1], [], []>} : vector<64x96xbf16>, vector<96x64xbf16>, vector<64x64xf32> -> vector<64x64xf32>
    %c0_13 = arith.constant 0 : index
    %c1 = arith.constant 1 : index
    %c0_14 = arith.constant 0 : index
    %c0_15 = arith.constant 0 : index
    %18 = vector.load %arg4[%c0_13, %c1, %c0_14, %c0_15] : memref<2x3x64x64xf32, #tpu.memory_space<vmem>>, vector<1x1x64x64xf32>
    %19 = vector.shape_cast %18 : vector<1x1x64x64xf32> to vector<64x64xf32>
    %20 = vector.shape_cast %17 : vector<64x64xf32> to vector<1x1x64x64xf32>
    tpu.vector_store %arg4[%c0_13, %c1, %c0_14, %c0_15], %20 {strides = array<i32>} : memref<2x3x64x64xf32, #tpu.memory_space<vmem>>, vector<1x1x64x64xf32>,
    %21 = vector.extract_strided_slice %7 {offsets = [0, 2, 0, 0], sizes = [1, 1, 96, 64], strides = [1, 1, 1, 1]} : vector<2x3x96x64xbf16> to vector<1x1x96x64xbf16>
    %22 = vector.shape_cast %21 : vector<1x1x96x64xbf16> to vector<96x64xbf16>
    %cst_16 = arith.constant dense<0.000000e+00> : vector<64x64xf32>
    %23 = tpu.matmul %8, %22, %cst_16 {dimension_numbers = #tpu.dot_dimension_numbers<[1], [0], [0], [1], [0, 0, 1, 1], [], []>} : vector<64x96xbf16>, vector<96x64xbf16>, vector<64x64xf32> -> vector<64x64xf32>
    %c0_17 = arith.constant 0 : index
    %c2 = arith.constant 2 : index
    %c0_18 = arith.constant 0 : index
    %c0_19 = arith.constant 0 : index
    %24 = vector.load %arg4[%c0_17, %c2, %c0_18, %c0_19] : memref<2x3x64x64xf32, #tpu.memory_space<vmem>>, vector<1x1x64x64xf32>
    %25 = vector.shape_cast %24 : vector<1x1x64x64xf32> to vector<64x64xf32>
    %26 = vector.shape_cast %23 : vector<64x64xf32> to vector<1x1x64x64xf32>
    tpu.vector_store %arg4[%c0_17, %c2, %c0_18, %c0_19], %26 {strides = array<i32>} : memref<2x3x64x64xf32, #tpu.memory_space<vmem>>, vector<1x1x64x64xf32>,
    %27 = vector.extract_strided_slice %7 {offsets = [1, 0, 0, 0], sizes = [1, 1, 96, 64], strides = [1, 1, 1, 1]} : vector<2x3x96x64xbf16> to vector<1x1x96x64xbf16>
    %28 = vector.shape_cast %27 : vector<1x1x96x64xbf16> to vector<96x64xbf16>
    %cst_20 = arith.constant dense<0.000000e+00> : vector<64x64xf32>
    %29 = tpu.matmul %8, %28, %cst_20 {dimension_numbers = #tpu.dot_dimension_numbers<[1], [0], [0], [1], [0, 0, 1, 1], [], []>} : vector<64x96xbf16>, vector<96x64xbf16>, vector<64x64xf32> -> vector<64x64xf32>
    %c1_21 = arith.constant 1 : index
    %c0_22 = arith.constant 0 : index
    %c0_23 = arith.constant 0 : index
    %c0_24 = arith.constant 0 : index
    %30 = vector.load %arg4[%c1_21, %c0_22, %c0_23, %c0_24] : memref<2x3x64x64xf32, #tpu.memory_space<vmem>>, vector<1x1x64x64xf32>
    %31 = vector.shape_cast %30 : vector<1x1x64x64xf32> to vector<64x64xf32>
    %32 = vector.shape_cast %29 : vector<64x64xf32> to vector<1x1x64x64xf32>
    tpu.vector_store %arg4[%c1_21, %c0_22, %c0_23, %c0_24], %32 {strides = array<i32>} : memref<2x3x64x64xf32, #tpu.memory_space<vmem>>, vector<1x1x64x64xf32>,
    %33 = vector.extract_strided_slice %7 {offsets = [1, 1, 0, 0], sizes = [1, 1, 96, 64], strides = [1, 1, 1, 1]} : vector<2x3x96x64xbf16> to vector<1x1x96x64xbf16>
    %34 = vector.shape_cast %33 : vector<1x1x96x64xbf16> to vector<96x64xbf16>
    %cst_25 = arith.constant dense<0.000000e+00> : vector<64x64xf32>
    %35 = tpu.matmul %8, %34, %cst_25 {dimension_numbers = #tpu.dot_dimension_numbers<[1], [0], [0], [1], [0, 0, 1, 1], [], []>} : vector<64x96xbf16>, vector<96x64xbf16>, vector<64x64xf32> -> vector<64x64xf32>
    %c1_26 = arith.constant 1 : index
    %c1_27 = arith.constant 1 : index
    %c0_28 = arith.constant 0 : index
    %c0_29 = arith.constant 0 : index
    %36 = vector.load %arg4[%c1_26, %c1_27, %c0_28, %c0_29] : memref<2x3x64x64xf32, #tpu.memory_space<vmem>>, vector<1x1x64x64xf32>
    %37 = vector.shape_cast %36 : vector<1x1x64x64xf32> to vector<64x64xf32>
    %38 = vector.shape_cast %35 : vector<64x64xf32> to vector<1x1x64x64xf32>
    tpu.vector_store %arg4[%c1_26, %c1_27, %c0_28, %c0_29], %38 {strides = array<i32>} : memref<2x3x64x64xf32, #tpu.memory_space<vmem>>, vector<1x1x64x64xf32>,
    %39 = vector.extract_strided_slice %7 {offsets = [1, 2, 0, 0], sizes = [1, 1, 96, 64], strides = [1, 1, 1, 1]} : vector<2x3x96x64xbf16> to vector<1x1x96x64xbf16>
    %40 = vector.shape_cast %39 : vector<1x1x96x64xbf16> to vector<96x64xbf16>
    %cst_30 = arith.constant dense<0.000000e+00> : vector<64x64xf32>
    %41 = tpu.matmul %8, %40, %cst_30 {dimension_numbers = #tpu.dot_dimension_numbers<[1], [0], [0], [1], [0, 0, 1, 1], [], []>} : vector<64x96xbf16>, vector<96x64xbf16>, vector<64x64xf32> -> vector<64x64xf32>
    %c1_31 = arith.constant 1 : index
    %c2_32 = arith.constant 2 : index
    %c0_33 = arith.constant 0 : index
    %c0_34 = arith.constant 0 : index
    %42 = vector.load %arg4[%c1_31, %c2_32, %c0_33, %c0_34] : memref<2x3x64x64xf32, #tpu.memory_space<vmem>>, vector<1x1x64x64xf32>
    %43 = vector.shape_cast %42 : vector<1x1x64x64xf32> to vector<64x64xf32>
    %44 = vector.shape_cast %41 : vector<64x64xf32> to vector<1x1x64x64xf32>
    tpu.vector_store %arg4[%c1_31, %c2_32, %c0_33, %c0_34], %44 {strides = array<i32>} : memref<2x3x64x64xf32, #tpu.memory_space<vmem>>, vector<1x1x64x64xf32>,
    return
  }
  func.func @transform_0(%arg0: i32) -> (i32, i32, i32, i32) {
    %c0_i32 = arith.constant 0 : i32
    %c0_i32_0 = arith.constant 0 : i32
    %c0_i32_1 = arith.constant 0 : i32
    %c0_i32_2 = arith.constant 0 : i32
    return %arg0, %c0_i32, %c0_i32_0, %c0_i32_1 : i32, i32, i32, i32
  }
  func.func @transform_1(%arg0: i32) -> (i32, i32) {
    %c0_i32 = arith.constant 0 : i32
    %c0_i32_0 = arith.constant 0 : i32
    %c0_i32_1 = arith.constant 0 : i32
    return %c0_i32, %c0_i32_0 : i32, i32
  }
  func.func @transform_2(%arg0: i32) -> (i32, i32) {
    %c0_i32 = arith.constant 0 : i32
    %c0_i32_0 = arith.constant 0 : i32
    %c0_i32_1 = arith.constant 0 : i32
    return %c0_i32, %c0_i32_0 : i32, i32
  }
  func.func @transform_3(%arg0: i32) -> (i32, i32, i32, i32) {
    %c0_i32 = arith.constant 0 : i32
    %c0_i32_0 = arith.constant 0 : i32
    %c0_i32_1 = arith.constant 0 : i32
    %c0_i32_2 = arith.constant 0 : i32
    return %arg0, %c0_i32, %c0_i32_0, %c0_i32_1 : i32, i32, i32, i32
  }
}

</mosaic_0001>

<llo_original>
// kernel: tpu_custom_call.1
$region0: #{tpu_custom_call.1}
  #allocation0 [shape = 'u32[]', space=smem, size = 0x4, offset = 0x4, fixed_abs, tag = 'smem constant byte address 0x4 - core index']
  #allocation1 [shape = 'u32[144,128]{1,0:T(1,128)}', space=vmem, size = 0x12000, scoped, tag = 'internal scratch']
  %s0 = inlined_call_operand.vmem [shape: u8[2,3,96,80], index: 0, kind: input, shape index: {}]
  %s1 = inlined_call_operand.vmem [shape: bf16[64,96], index: 1, kind: input, shape index: {}]
  %s2 = inlined_call_operand.vmem [shape: bf16[80,64], index: 2, kind: input, shape index: {}]
  %s3 = inlined_call_operand.hbm [shape: f32[2,3,64,64], index: 3, kind: output, shape index: {}]
  %s4 = sld [smem:[#allocation0]]
  $region22: #{tpu_custom_call.1} parent=0
    _
  %s6 = ssub.s32 1, %s4
  %s7 = scalar_select 0, %s6, %s4
  $region1: #{tpu_custom_call.1} parent=0
    #allocation2 [shape = 'u8[196608]{0}', space=vmem, size = 0x30000, scoped, tag = 'output window, operand 0, single buffered']
    #allocation3 [shape = 's32[1]{0}', space=sflag, size = 0x4, scoped, tag = 'scoped memory for tpu_custom_call.1']
    %8 = vsyncpa [#allocation3], 0
    // Predicated region
    $region2: #{tpu_custom_call.1} parent=1 // pred_check
      _
    $region3: #{tpu_custom_call.1} parent=1 // pred_check_branch
      %10 = sbr.rel (0) target = $region5
    $region4: #{tpu_custom_call.1} parent=1 // pred_region
      _
    $region5: #{tpu_custom_call.1} parent=1 // pred_fallthru
      _
    // Predicated region
    $region6: #{tpu_custom_call.1} parent=1 // pred_check
      _
    $region7: #{tpu_custom_call.1} parent=1 // pred_check_branch
      %12 = sbr.rel (0) target = $region9
    $region8: #{tpu_custom_call.1} parent=1 // pred_region
      _
    $region9: #{tpu_custom_call.1} parent=1 // pred_fallthru
      _
    // Predicated region
    $region10: #{tpu_custom_call.1} parent=1 // pred_check
      _
    $region11: #{tpu_custom_call.1} parent=1 // pred_check_branch
      %14 = sbr.rel (0) target = $region13
    $region12: #{tpu_custom_call.1} parent=1 // pred_region
      _
    $region13: #{tpu_custom_call.1} parent=1 // pred_fallthru
      _
    %v16 = vld [vmem:[%s0] sm:$0xff]
    %v17 = vld [vmem:[%s0 + $0x8] sm:$0xff]
    %v18 = vld [vmem:[%s0 + $0x10] sm:$0xff]
    %v19 = vld [vmem:[%s0 + $0x18] sm:$0xff]
    %v20 = vld [vmem:[%s0 + $0x20] sm:$0xff]
    %v21 = vld [vmem:[%s0 + $0x28] sm:$0xff]
    %v22 = vld [vmem:[%s0 + $0x30] sm:$0xff]
    %v23 = vld [vmem:[%s0 + $0x38] sm:$0xff]
    %v24 = vld [vmem:[%s0 + $0x40] sm:$0xff]
    %v25 = vld [vmem:[%s0 + $0x48] sm:$0xff]
    %v26 = vld [vmem:[%s0 + $0x50] sm:$0xff]
    %v27 = vld [vmem:[%s0 + $0x58] sm:$0xff]
    %v28 = vld [vmem:[%s0 + $0x60] sm:$0xff]
    %v29 = vld [vmem:[%s0 + $0x68] sm:$0xff]
    %v30 = vld [vmem:[%s0 + $0x70] sm:$0xff]
    %v31 = vld [vmem:[%s0 + $0x78] sm:$0xff]
    %v32 = vld [vmem:[%s0 + $0x80] sm:$0xff]
    %v33 = vld [vmem:[%s0 + $0x88] sm:$0xff]
    %v34 = vunpack.c.0.s8 %v16
    %v35 = vunpack.c.1.s8 %v16
    %v36 = vunpack.c.2.s8 %v16
    %v37 = vunpack.c.3.s8 %v16
    %v38 = vunpack.c.0.s8 %v17
    %v39 = vunpack.c.1.s8 %v17
    %v40 = vunpack.c.2.s8 %v17
    %v41 = vunpack.c.3.s8 %v17
    %v42 = vunpack.c.0.s8 %v18
    %v43 = vunpack.c.1.s8 %v18
    %v44 = vunpack.c.2.s8 %v18
    %v45 = vunpack.c.3.s8 %v18
    %v46 = vunpack.c.0.s8 %v19
    %v47 = vunpack.c.1.s8 %v19
    %v48 = vunpack.c.2.s8 %v19
    %v49 = vunpack.c.3.s8 %v19
    %v50 = vunpack.c.0.s8 %v20
    %v51 = vunpack.c.1.s8 %v20
    %v52 = vunpack.c.2.s8 %v20
    %v53 = vunpack.c.3.s8 %v20
    %v54 = vunpack.c.0.s8 %v21
    %v55 = vunpack.c.1.s8 %v21
    %v56 = vunpack.c.2.s8 %v21
    %v57 = vunpack.c.3.s8 %v21
    %v58 = vunpack.c.0.s8 %v22
    %v59 = vunpack.c.1.s8 %v22
    %v60 = vunpack.c.2.s8 %v22
    %v61 = vunpack.c.3.s8 %v22
    %v62 = vunpack.c.0.s8 %v23
    %v63 = vunpack.c.1.s8 %v23
    %v64 = vunpack.c.2.s8 %v23
    %v65 = vunpack.c.3.s8 %v23
    %v66 = vunpack.c.0.s8 %v24
    %v67 = vunpack.c.1.s8 %v24
    %v68 = vunpack.c.2.s8 %v24
    %v69 = vunpack.c.3.s8 %v24
    %v70 = vunpack.c.0.s8 %v25
    %v71 = vunpack.c.1.s8 %v25
    %v72 = vunpack.c.2.s8 %v25
    %v73 = vunpack.c.3.s8 %v25
    %v74 = vunpack.c.0.s8 %v26
    %v75 = vunpack.c.1.s8 %v26
    %v76 = vunpack.c.2.s8 %v26
    %v77 = vunpack.c.3.s8 %v26
    %v78 = vunpack.c.0.s8 %v27
    %v79 = vunpack.c.1.s8 %v27
    %v80 = vunpack.c.2.s8 %v27
    %v81 = vunpack.c.3.s8 %v27
    %v82 = vunpack.c.0.s8 %v28
    %v83 = vunpack.c.1.s8 %v28
    %v84 = vunpack.c.2.s8 %v28
    %v85 = vunpack.c.3.s8 %v28
    %v86 = vunpack.c.0.s8 %v29
    %v87 = vunpack.c.1.s8 %v29
    %v88 = vunpack.c.2.s8 %v29
    %v89 = vunpack.c.3.s8 %v29
    %v90 = vunpack.c.0.s8 %v30
    %v91 = vunpack.c.1.s8 %v30
    %v92 = vunpack.c.2.s8 %v30
    %v93 = vunpack.c.3.s8 %v30
    %v94 = vunpack.c.0.s8 %v31
    %v95 = vunpack.c.1.s8 %v31
    %v96 = vunpack.c.2.s8 %v31
    %v97 = vunpack.c.3.s8 %v31
    %v98 = vunpack.c.0.s8 %v32
    %v99 = vunpack.c.1.s8 %v32
    %v100 = vunpack.c.2.s8 %v32
    %v101 = vunpack.c.3.s8 %v32
    %v102 = vunpack.c.0.s8 %v33
    %v103 = vunpack.c.1.s8 %v33
    %v104 = vunpack.c.2.s8 %v33
    %v105 = vunpack.c.3.s8 %v33
    %v106 = vand.u32 %v34, 255
    %v107 = vand.u32 %v35, 255
    %v108 = vand.u32 %v36, 255
    %v109 = vand.u32 %v37, 255
    %v110 = vand.u32 %v38, 255
    %v111 = vand.u32 %v39, 255
    %v112 = vand.u32 %v40, 255
    %v113 = vand.u32 %v41, 255
    %v114 = vand.u32 %v42, 255
    %v115 = vand.u32 %v43, 255
    %v116 = vand.u32 %v44, 255
    %v117 = vand.u32 %v45, 255
    %v118 = vand.u32 %v46, 255
    %v119 = vand.u32 %v47, 255
    %v120 = vand.u32 %v48, 255
    %v121 = vand.u32 %v49, 255
    %v122 = vand.u32 %v50, 255
    %v123 = vand.u32 %v51, 255
    %v124 = vand.u32 %v52, 255
    %v125 = vand.u32 %v53, 255
    %v126 = vand.u32 %v54, 255
    %v127 = vand.u32 %v55, 255
    %v128 = vand.u32 %v56, 255
    %v129 = vand.u32 %v57, 255
    %v130 = vand.u32 %v58, 255
    %v131 = vand.u32 %v59, 255
    %v132 = vand.u32 %v60, 255
    %v133 = vand.u32 %v61, 255
    %v134 = vand.u32 %v62, 255
    %v135 = vand.u32 %v63, 255
    %v136 = vand.u32 %v64, 255
    %v137 = vand.u32 %v65, 255
    %v138 = vand.u32 %v66, 255
    %v139 = vand.u32 %v67, 255
    %v140 = vand.u32 %v68, 255
    %v141 = vand.u32 %v69, 255
    %v142 = vand.u32 %v70, 255
    %v143 = vand.u32 %v71, 255
    %v144 = vand.u32 %v72, 255
    %v145 = vand.u32 %v73, 255
    %v146 = vand.u32 %v74, 255
    %v147 = vand.u32 %v75, 255
    %v148 = vand.u32 %v76, 255
    %v149 = vand.u32 %v77, 255
    %v150 = vand.u32 %v78, 255
    %v151 = vand.u32 %v79, 255
    %v152 = vand.u32 %v80, 255
    %v153 = vand.u32 %v81, 255
    %v154 = vand.u32 %v82, 255
    %v155 = vand.u32 %v83, 255
    %v156 = vand.u32 %v84, 255
    %v157 = vand.u32 %v85, 255
    %v158 = vand.u32 %v86, 255
    %v159 = vand.u32 %v87, 255
    %v160 = vand.u32 %v88, 255
    %v161 = vand.u32 %v89, 255
    %v162 = vand.u32 %v90, 255
    %v163 = vand.u32 %v91, 255
    %v164 = vand.u32 %v92, 255
    %v165 = vand.u32 %v93, 255
    %v166 = vand.u32 %v94, 255
    %v167 = vand.u32 %v95, 255
    %v168 = vand.u32 %v96, 255
    %v169 = vand.u32 %v97, 255
    %v170 = vand.u32 %v98, 255
    %v171 = vand.u32 %v99, 255
    %v172 = vand.u32 %v100, 255
    %v173 = vand.u32 %v101, 255
    %v174 = vand.u32 %v102, 255
    %v175 = vand.u32 %v103, 255
    %v176 = vand.u32 %v104, 255
    %v177 = vand.u32 %v105, 255
    %v178 = vcvt.s32.f32 %v106
    %v179 = vcvt.s32.f32 %v107
    %v180 = vcvt.s32.f32 %v108
    %v181 = vcvt.s32.f32 %v109
    %v182 = vcvt.s32.f32 %v110
    %v183 = vcvt.s32.f32 %v111
    %v184 = vcvt.s32.f32 %v112
    %v185 = vcvt.s32.f32 %v113
    %v186 = vcvt.s32.f32 %v114
    %v187 = vcvt.s32.f32 %v115
    %v188 = vcvt.s32.f32 %v116
    %v189 = vcvt.s32.f32 %v117
    %v190 = vcvt.s32.f32 %v118
    %v191 = vcvt.s32.f32 %v119
    %v192 = vcvt.s32.f32 %v120
    %v193 = vcvt.s32.f32 %v121
    %v194 = vcvt.s32.f32 %v122
    %v195 = vcvt.s32.f32 %v123
    %v196 = vcvt.s32.f32 %v124
    %v197 = vcvt.s32.f32 %v125
    %v198 = vcvt.s32.f32 %v126
    %v199 = vcvt.s32.f32 %v127
    %v200 = vcvt.s32.f32 %v128
    %v201 = vcvt.s32.f32 %v129
    %v202 = vcvt.s32.f32 %v130
    %v203 = vcvt.s32.f32 %v131
    %v204 = vcvt.s32.f32 %v132
    %v205 = vcvt.s32.f32 %v133
    %v206 = vcvt.s32.f32 %v134
    %v207 = vcvt.s32.f32 %v135
    %v208 = vcvt.s32.f32 %v136
    %v209 = vcvt.s32.f32 %v137
    %v210 = vcvt.s32.f32 %v138
    %v211 = vcvt.s32.f32 %v139
    %v212 = vcvt.s32.f32 %v140
    %v213 = vcvt.s32.f32 %v141
    %v214 = vcvt.s32.f32 %v142
    %v215 = vcvt.s32.f32 %v143
    %v216 = vcvt.s32.f32 %v144
    %v217 = vcvt.s32.f32 %v145
    %v218 = vcvt.s32.f32 %v146
    %v219 = vcvt.s32.f32 %v147
    %v220 = vcvt.s32.f32 %v148
    %v221 = vcvt.s32.f32 %v149
    %v222 = vcvt.s32.f32 %v150
    %v223 = vcvt.s32.f32 %v151
    %v224 = vcvt.s32.f32 %v152
    %v225 = vcvt.s32.f32 %v153
    %v226 = vcvt.s32.f32 %v154
    %v227 = vcvt.s32.f32 %v155
    %v228 = vcvt.s32.f32 %v156
    %v229 = vcvt.s32.f32 %v157
    %v230 = vcvt.s32.f32 %v158
    %v231 = vcvt.s32.f32 %v159
    %v232 = vcvt.s32.f32 %v160
    %v233 = vcvt.s32.f32 %v161
    %v234 = vcvt.s32.f32 %v162
    %v235 = vcvt.s32.f32 %v163
    %v236 = vcvt.s32.f32 %v164
    %v237 = vcvt.s32.f32 %v165
    %v238 = vcvt.s32.f32 %v166
    %v239 = vcvt.s32.f32 %v167
    %v240 = vcvt.s32.f32 %v168
    %v241 = vcvt.s32.f32 %v169
    %v242 = vcvt.s32.f32 %v170
    %v243 = vcvt.s32.f32 %v171
    %v244 = vcvt.s32.f32 %v172
    %v245 = vcvt.s32.f32 %v173
    %v246 = vcvt.s32.f32 %v174
    %v247 = vcvt.s32.f32 %v175
    %v248 = vcvt.s32.f32 %v176
    %v249 = vcvt.s32.f32 %v177
    %v250 = vpack.c.bf16 %v179, %v178
    %v251 = vpack.c.bf16 %v181, %v180
    %v252 = vpack.c.bf16 %v183, %v182
    %v253 = vpack.c.bf16 %v185, %v184
    %v254 = vpack.c.bf16 %v187, %v186
    %v255 = vpack.c.bf16 %v189, %v188
    %v256 = vpack.c.bf16 %v191, %v190
    %v257 = vpack.c.bf16 %v193, %v192
    %v258 = vpack.c.bf16 %v195, %v194
    %v259 = vpack.c.bf16 %v197, %v196
    %v260 = vpack.c.bf16 %v199, %v198
    %v261 = vpack.c.bf16 %v201, %v200
    %v262 = vpack.c.bf16 %v203, %v202
    %v263 = vpack.c.bf16 %v205, %v204
    %v264 = vpack.c.bf16 %v207, %v206
    %v265 = vpack.c.bf16 %v209, %v208
    %v266 = vpack.c.bf16 %v211, %v210
    %v267 = vpack.c.bf16 %v213, %v212
    %v268 = vpack.c.bf16 %v215, %v214
    %v269 = vpack.c.bf16 %v217, %v216
    %v270 = vpack.c.bf16 %v219, %v218
    %v271 = vpack.c.bf16 %v221, %v220
    %v272 = vpack.c.bf16 %v223, %v222
    %v273 = vpack.c.bf16 %v225, %v224
    %v274 = vpack.c.bf16 %v227, %v226
    %v275 = vpack.c.bf16 %v229, %v228
    %v276 = vpack.c.bf16 %v231, %v230
    %v277 = vpack.c.bf16 %v233, %v232
    %v278 = vpack.c.bf16 %v235, %v234
    %v279 = vpack.c.bf16 %v237, %v236
    %v280 = vpack.c.bf16 %v239, %v238
    %v281 = vpack.c.bf16 %v241, %v240
    %v282 = vpack.c.bf16 %v243, %v242
    %v283 = vpack.c.bf16 %v245, %v244
    %v284 = vpack.c.bf16 %v247, %v246
    %v285 = vpack.c.bf16 %v249, %v248
    %v286 = vld [vmem:[%s2] sm:$0xf]
    %v287 = vld [vmem:[%s2 + $0x4] sm:$0xf]
    %v288 = vld [vmem:[%s2 + $0x8] sm:$0xf]
    %v289 = vld [vmem:[%s2 + $0xc] sm:$0xf]
    %v290 = vld [vmem:[%s2 + $0x10] sm:$0xf]
    %v291 = vld [vmem:[%s2 + $0x14] sm:$0xf]
    %v292 = vld [vmem:[%s2 + $0x18] sm:$0xf]
    %v293 = vld [vmem:[%s2 + $0x1c] sm:$0xf]
    %v294 = vld [vmem:[%s2 + $0x20] sm:$0xf]
    %v295 = vld [vmem:[%s2 + $0x24] sm:$0xf]
    %v306 = vunpack.c.l.b16 %v286
    %v307 = vunpack.c.l.b16 %v287
    %v308 = vunpack.c.l.b16 %v288
    %v309 = vunpack.c.l.b16 %v289
    %v310 = vunpack.c.l.b16 %v290
    %v311 = vunpack.c.l.b16 %v291
    %v312 = vunpack.c.l.b16 %v292
    %v313 = vunpack.c.l.b16 %v293
    %v314 = vunpack.c.l.b16 %v294
    %v315 = vunpack.c.l.b16 %v295
    %v316 = vpack.c.b16 %v307, %v306
    %v317 = vpack.c.b16 %v309, %v308
    %v318 = vpack.c.b16 %v311, %v310
    %v319 = vpack.c.b16 %v313, %v312
    %v320 = vpack.c.b16 %v315, %v314
    %vm326 = vcmask 654336
    %v328 = vsel %vm326, %v250, 0
    %v331 = vsel %vm326, %v251, 0
    %v334 = vsel %vm326, %v252, 0
    %v337 = vsel %vm326, %v253, 0
    %v340 = vsel %vm326, %v254, 0
    %v343 = vsel %vm326, %v255, 0
    %v346 = vsel %vm326, %v256, 0
    %v349 = vsel %vm326, %v257, 0
    %v352 = vsel %vm326, %v258, 0
    %v355 = vsel %vm326, %v259, 0
    %v358 = vsel %vm326, %v260, 0
    %v361 = vsel %vm326, %v261, 0
    %v364 = vsel %vm326, %v262, 0
    %v367 = vsel %vm326, %v263, 0
    %v370 = vsel %vm326, %v264, 0
    %v373 = vsel %vm326, %v265, 0
    %v376 = vsel %vm326, %v266, 0
    %v379 = vsel %vm326, %v267, 0
    %v382 = vsel %vm326, %v268, 0
    %v385 = vsel %vm326, %v269, 0
    %v388 = vsel %vm326, %v270, 0
    %v391 = vsel %vm326, %v271, 0
    %v394 = vsel %vm326, %v272, 0
    %v397 = vsel %vm326, %v273, 0
    %v400 = vsel %vm326, %v274, 0
    %v403 = vsel %vm326, %v275, 0
    %v406 = vsel %vm326, %v276, 0
    %v409 = vsel %vm326, %v277, 0
    %v412 = vsel %vm326, %v278, 0
    %v415 = vsel %vm326, %v279, 0
    %v418 = vsel %vm326, %v280, 0
    %v421 = vsel %vm326, %v281, 0
    %v424 = vsel %vm326, %v282, 0
    %v427 = vsel %vm326, %v283, 0
    %v430 = vsel %vm326, %v284, 0
    %v433 = vsel %vm326, %v285, 0
    %435 = vmatprep.subr.bf16.mxu0 0
    %436 = vmatpush1.bf16.msra.mxu0 %v316
    %437 = vmatprep.subr.bf16.mxu0 0
    %438 = vmatpush1.bf16.msra.mxu0 %v317
    %439 = vmatprep.subr.bf16.mxu0 0
    %440 = vmatpush1.bf16.msra.mxu0 %v318
    %441 = vmatprep.subr.bf16.mxu0 0
    %442 = vmatpush1.bf16.msra.mxu0 %v319
    %443 = vmatprep.subr.bf16.mxu0 0
    %444 = vmatpush1.bf16.msra.mxu0 %v320
    %445 = vmatprep.subr.bf16.mxu0 0
    %446 = vmatpush1.bf16.msra.mxu0 0
    %447 = vmatprep.subr.bf16.mxu0 0
    %448 = vmatpush1.bf16.msra.mxu0 0
    %449 = vmatprep.subr.bf16.mxu0 0
    %450 = vmatpush1.bf16.msra.mxu0 0
    %451 = vmatprep.subr.bf16.mxu0 0
    %452 = vmatpush1.bf16.msra.mxu0 0
    %453 = vmatprep.subr.bf16.mxu0 0
    %454 = vmatpush1.bf16.msra.mxu0 0
    %455 = vmatprep.subr.bf16.mxu0 0
    %456 = vmatpush1.bf16.msra.mxu0 0
    %457 = vmatprep.subr.bf16.mxu0 0
    %458 = vmatpush1.bf16.msra.mxu0 0
    %459 = vmatprep.subr.bf16.mxu0 0
    %460 = vmatpush1.bf16.msra.mxu0 0
    %461 = vmatprep.subr.bf16.mxu0 0
    %462 = vmatpush1.bf16.msra.mxu0 0
    %463 = vmatprep.subr.bf16.mxu0 0
    %464 = vmatpush1.bf16.msra.mxu0 0
    %465 = vmatprep.subr.bf16.mxu0 0
    %466 = vmatpush1.bf16.msra.mxu0 0
    %467 = vmatprep.mubr.bf16.mxu0 0
    %468 = vmatmul.mubr.bf16.gmra.mrb[0].mxu0 %v328
    %v469 = vpop.f32.mrb[0].mxu0
    %v470 = vadd.f32 0.0, %v469
    %v471 = vpop.f32.mrb[0].mxu0
    %v472 = vpop.f32.mrb[0].mxu0
    %v473 = vadd.f32 0.0, %v472
    %v474 = vpop.f32.mrb[0].mxu0
    %475 = vmatprep.mubr.bf16.mxu0 0
    %476 = vmatmul.mubr.bf16.gmra.mrb[0].mxu0 %v331
    %v477 = vpop.f32.mrb[0].mxu0
    %v478 = vadd.f32 0.0, %v477
    %v479 = vpop.f32.mrb[0].mxu0
    %v480 = vpop.f32.mrb[0].mxu0
    %v481 = vadd.f32 0.0, %v480
    %v482 = vpop.f32.mrb[0].mxu0
    %483 = vmatprep.mubr.bf16.mxu0 0
    %484 = vmatmul.mubr.bf16.gmra.mrb[0].mxu0 %v334
    %v485 = vpop.f32.mrb[0].mxu0
    %v486 = vadd.f32 0.0, %v485
    %v487 = vpop.f32.mrb[0].mxu0
    %v488 = vpop.f32.mrb[0].mxu0
    %v489 = vadd.f32 0.0, %v488
    %v490 = vpop.f32.mrb[0].mxu0
    %491 = vmatprep.mubr.bf16.mxu0 0
    %492 = vmatmul.mubr.bf16.gmra.mrb[0].mxu0 %v337
    %v493 = vpop.f32.mrb[0].mxu0
    %v494 = vadd.f32 0.0, %v493
    %v495 = vpop.f32.mrb[0].mxu0
    %v496 = vpop.f32.mrb[0].mxu0
    %v497 = vadd.f32 0.0, %v496
    %v498 = vpop.f32.mrb[0].mxu0
    %499 = vmatprep.mubr.bf16.mxu0 0
    %500 = vmatmul.mubr.bf16.gmra.mrb[0].mxu0 %v340
    %v501 = vpop.f32.mrb[0].mxu0
    %v502 = vadd.f32 0.0, %v501
    %v503 = vpop.f32.mrb[0].mxu0
    %v504 = vpop.f32.mrb[0].mxu0
    %v505 = vadd.f32 0.0, %v504
    %v506 = vpop.f32.mrb[0].mxu0
    %507 = vmatprep.mubr.bf16.mxu0 0
    %508 = vmatmul.mubr.bf16.gmra.mrb[0].mxu0 %v343
    %v509 = vpop.f32.mrb[0].mxu0
    %v510 = vadd.f32 0.0, %v509
    %v511 = vpop.f32.mrb[0].mxu0
    %v512 = vpop.f32.mrb[0].mxu0
    %v513 = vadd.f32 0.0, %v512
    %v514 = vpop.f32.mrb[0].mxu0
    %515 = vmatprep.mubr.bf16.mxu0 0
    %516 = vmatmul.mubr.bf16.gmra.mrb[0].mxu0 %v346
    %v517 = vpop.f32.mrb[0].mxu0
    %v518 = vadd.f32 0.0, %v517
    %v519 = vpop.f32.mrb[0].mxu0
    %v520 = vpop.f32.mrb[0].mxu0
    %v521 = vadd.f32 0.0, %v520
    %v522 = vpop.f32.mrb[0].mxu0
    %523 = vmatprep.mubr.bf16.mxu0 0
    %524 = vmatmul.mubr.bf16.gmra.mrb[0].mxu0 %v349
    %v525 = vpop.f32.mrb[0].mxu0
    %v526 = vadd.f32 0.0, %v525
    %v527 = vpop.f32.mrb[0].mxu0
    %v528 = vpop.f32.mrb[0].mxu0
    %v529 = vadd.f32 0.0, %v528
    %v530 = vpop.f32.mrb[0].mxu0
    %531 = vmatprep.mubr.bf16.mxu0 0
    %532 = vmatmul.mubr.bf16.gmra.mrb[0].mxu0 %v352
    %v533 = vpop.f32.mrb[0].mxu0
    %v534 = vadd.f32 0.0, %v533
    %v535 = vpop.f32.mrb[0].mxu0
    %v536 = vpop.f32.mrb[0].mxu0
    %v537 = vadd.f32 0.0, %v536
    %v538 = vpop.f32.mrb[0].mxu0
    %539 = vmatprep.mubr.bf16.mxu0 0
    %540 = vmatmul.mubr.bf16.gmra.mrb[0].mxu0 %v355
    %v541 = vpop.f32.mrb[0].mxu0
    %v542 = vadd.f32 0.0, %v541
    %v543 = vpop.f32.mrb[0].mxu0
    %v544 = vpop.f32.mrb[0].mxu0
    %v545 = vadd.f32 0.0, %v544
    %v546 = vpop.f32.mrb[0].mxu0
    %547 = vmatprep.mubr.bf16.mxu0 0
    %548 = vmatmul.mubr.bf16.gmra.mrb[0].mxu0 %v358
    %v549 = vpop.f32.mrb[0].mxu0
    %v550 = vadd.f32 0.0, %v549
    %v551 = vpop.f32.mrb[0].mxu0
    %v552 = vpop.f32.mrb[0].mxu0
    %v553 = vadd.f32 0.0, %v552
    %v554 = vpop.f32.mrb[0].mxu0
    %555 = vmatprep.mubr.bf16.mxu0 0
    %556 = vmatmul.mubr.bf16.gmra.mrb[0].mxu0 %v361
    %v557 = vpop.f32.mrb[0].mxu0
    %v558 = vadd.f32 0.0, %v557
    %v559 = vpop.f32.mrb[0].mxu0
    %v560 = vpop.f32.mrb[0].mxu0
    %v561 = vadd.f32 0.0, %v560
    %v562 = vpop.f32.mrb[0].mxu0
    %563 = vmatprep.mubr.bf16.mxu0 0
    %564 = vmatmul.mubr.bf16.gmra.mrb[0].mxu0 %v364
    %v565 = vpop.f32.mrb[0].mxu0
    %v566 = vadd.f32 0.0, %v565
    %v567 = vpop.f32.mrb[0].mxu0
    %v568 = vpop.f32.mrb[0].mxu0
    %v569 = vadd.f32 0.0, %v568
    %v570 = vpop.f32.mrb[0].mxu0
    %571 = vmatprep.mubr.bf16.mxu0 0
    %572 = vmatmul.mubr.bf16.gmra.mrb[0].mxu0 %v367
    %v573 = vpop.f32.mrb[0].mxu0
    %v574 = vadd.f32 0.0, %v573
    %v575 = vpop.f32.mrb[0].mxu0
    %v576 = vpop.f32.mrb[0].mxu0
    %v577 = vadd.f32 0.0, %v576
    %v578 = vpop.f32.mrb[0].mxu0
    %579 = vmatprep.mubr.bf16.mxu0 0
    %580 = vmatmul.mubr.bf16.gmra.mrb[0].mxu0 %v370
    %v581 = vpop.f32.mrb[0].mxu0
    %v582 = vadd.f32 0.0, %v581
    %v583 = vpop.f32.mrb[0].mxu0
    %v584 = vpop.f32.mrb[0].mxu0
    %v585 = vadd.f32 0.0, %v584
    %v586 = vpop.f32.mrb[0].mxu0
    %587 = vmatprep.mubr.bf16.mxu0 0
    %588 = vmatmul.mubr.bf16.gmra.mrb[0].mxu0 %v373
    %v589 = vpop.f32.mrb[0].mxu0
    %v590 = vadd.f32 0.0, %v589
    %v591 = vpop.f32.mrb[0].mxu0
    %v592 = vpop.f32.mrb[0].mxu0
    %v593 = vadd.f32 0.0, %v592
    %v594 = vpop.f32.mrb[0].mxu0
    %595 = vmatprep.mubr.bf16.mxu0 0
    %596 = vmatmul.mubr.bf16.gmra.mrb[0].mxu0 %v376
    %v597 = vpop.f32.mrb[0].mxu0
    %v598 = vadd.f32 0.0, %v597
    %v599 = vpop.f32.mrb[0].mxu0
    %v600 = vpop.f32.mrb[0].mxu0
    %v601 = vadd.f32 0.0, %v600
    %v602 = vpop.f32.mrb[0].mxu0
    %603 = vmatprep.mubr.bf16.mxu0 0
    %604 = vmatmul.mubr.bf16.gmra.mrb[0].mxu0 %v379
    %v605 = vpop.f32.mrb[0].mxu0
    %v606 = vadd.f32 0.0, %v605
    %v607 = vpop.f32.mrb[0].mxu0
    %v608 = vpop.f32.mrb[0].mxu0
    %v609 = vadd.f32 0.0, %v608
    %v610 = vpop.f32.mrb[0].mxu0
    %611 = vmatprep.mubr.bf16.mxu0 0
    %612 = vmatmul.mubr.bf16.gmra.mrb[0].mxu0 %v382
    %v613 = vpop.f32.mrb[0].mxu0
    %v614 = vadd.f32 0.0, %v613
    %v615 = vpop.f32.mrb[0].mxu0
    %v616 = vpop.f32.mrb[0].mxu0
    %v617 = vadd.f32 0.0, %v616
    %v618 = vpop.f32.mrb[0].mxu0
    %619 = vmatprep.mubr.bf16.mxu0 0
    %620 = vmatmul.mubr.bf16.gmra.mrb[0].mxu0 %v385
    %v621 = vpop.f32.mrb[0].mxu0
    %v622 = vadd.f32 0.0, %v621
    %v623 = vpop.f32.mrb[0].mxu0
    %v624 = vpop.f32.mrb[0].mxu0
    %v625 = vadd.f32 0.0, %v624
    %v626 = vpop.f32.mrb[0].mxu0
    %627 = vmatprep.mubr.bf16.mxu0 0
    %628 = vmatmul.mubr.bf16.gmra.mrb[0].mxu0 %v388
    %v629 = vpop.f32.mrb[0].mxu0
    %v630 = vadd.f32 0.0, %v629
    %v631 = vpop.f32.mrb[0].mxu0
    %v632 = vpop.f32.mrb[0].mxu0
    %v633 = vadd.f32 0.0, %v632
    %v634 = vpop.f32.mrb[0].mxu0
    %635 = vmatprep.mubr.bf16.mxu0 0
    %636 = vmatmul.mubr.bf16.gmra.mrb[0].mxu0 %v391
    %v637 = vpop.f32.mrb[0].mxu0
    %v638 = vadd.f32 0.0, %v637
    %v639 = vpop.f32.mrb[0].mxu0
    %v640 = vpop.f32.mrb[0].mxu0
    %v641 = vadd.f32 0.0, %v640
    %v642 = vpop.f32.mrb[0].mxu0
    %643 = vmatprep.mubr.bf16.mxu0 0
    %644 = vmatmul.mubr.bf16.gmra.mrb[0].mxu0 %v394
    %v645 = vpop.f32.mrb[0].mxu0
    %v646 = vadd.f32 0.0, %v645
    %v647 = vpop.f32.mrb[0].mxu0
    %v648 = vpop.f32.mrb[0].mxu0
    %v649 = vadd.f32 0.0, %v648
    %v650 = vpop.f32.mrb[0].mxu0
    %651 = vmatprep.mubr.bf16.mxu0 0
    %652 = vmatmul.mubr.bf16.gmra.mrb[0].mxu0 %v397
    %v653 = vpop.f32.mrb[0].mxu0
    %v654 = vadd.f32 0.0, %v653
    %v655 = vpop.f32.mrb[0].mxu0
    %v656 = vpop.f32.mrb[0].mxu0
    %v657 = vadd.f32 0.0, %v656
    %v658 = vpop.f32.mrb[0].mxu0
    %659 = vmatprep.mubr.bf16.mxu0 0
    %660 = vmatmul.mubr.bf16.gmra.mrb[0].mxu0 %v400
    %v661 = vpop.f32.mrb[0].mxu0
    %v662 = vadd.f32 0.0, %v661
    %v663 = vpop.f32.mrb[0].mxu0
    %v664 = vpop.f32.mrb[0].mxu0
    %v665 = vadd.f32 0.0, %v664
    %v666 = vpop.f32.mrb[0].mxu0
    %667 = vmatprep.mubr.bf16.mxu0 0
    %668 = vmatmul.mubr.bf16.gmra.mrb[0].mxu0 %v403
    %v669 = vpop.f32.mrb[0].mxu0
    %v670 = vadd.f32 0.0, %v669
    %v671 = vpop.f32.mrb[0].mxu0
    %v672 = vpop.f32.mrb[0].mxu0
    %v673 = vadd.f32 0.0, %v672
    %v674 = vpop.f32.mrb[0].mxu0
    %675 = vmatprep.mubr.bf16.mxu0 0
    %676 = vmatmul.mubr.bf16.gmra.mrb[0].mxu0 %v406
    %v677 = vpop.f32.mrb[0].mxu0
    %v678 = vadd.f32 0.0, %v677
    %v679 = vpop.f32.mrb[0].mxu0
    %v680 = vpop.f32.mrb[0].mxu0
    %v681 = vadd.f32 0.0, %v680
    %v682 = vpop.f32.mrb[0].mxu0
    %683 = vmatprep.mubr.bf16.mxu0 0
    %684 = vmatmul.mubr.bf16.gmra.mrb[0].mxu0 %v409
    %v685 = vpop.f32.mrb[0].mxu0
    %v686 = vadd.f32 0.0, %v685
    %v687 = vpop.f32.mrb[0].mxu0
    %v688 = vpop.f32.mrb[0].mxu0
    %v689 = vadd.f32 0.0, %v688
    %v690 = vpop.f32.mrb[0].mxu0
    %691 = vmatprep.mubr.bf16.mxu0 0
    %692 = vmatmul.mubr.bf16.gmra.mrb[0].mxu0 %v412
    %v693 = vpop.f32.mrb[0].mxu0
    %v694 = vadd.f32 0.0, %v693
    %v695 = vpop.f32.mrb[0].mxu0
    %v696 = vpop.f32.mrb[0].mxu0
    %v697 = vadd.f32 0.0, %v696
    %v698 = vpop.f32.mrb[0].mxu0
    %699 = vmatprep.mubr.bf16.mxu0 0
    %700 = vmatmul.mubr.bf16.gmra.mrb[0].mxu0 %v415
    %v701 = vpop.f32.mrb[0].mxu0
    %v702 = vadd.f32 0.0, %v701
    %v703 = vpop.f32.mrb[0].mxu0
    %v704 = vpop.f32.mrb[0].mxu0
    %v705 = vadd.f32 0.0, %v704
    %v706 = vpop.f32.mrb[0].mxu0
    %707 = vmatprep.mubr.bf16.mxu0 0
    %708 = vmatmul.mubr.bf16.gmra.mrb[0].mxu0 %v418
    %v709 = vpop.f32.mrb[0].mxu0
    %v710 = vadd.f32 0.0, %v709
    %v711 = vpop.f32.mrb[0].mxu0
    %v712 = vpop.f32.mrb[0].mxu0
    %v713 = vadd.f32 0.0, %v712
    %v714 = vpop.f32.mrb[0].mxu0
    %715 = vmatprep.mubr.bf16.mxu0 0
    %716 = vmatmul.mubr.bf16.gmra.mrb[0].mxu0 %v421
    %v717 = vpop.f32.mrb[0].mxu0
    %v718 = vadd.f32 0.0, %v717
    %v719 = vpop.f32.mrb[0].mxu0
    %v720 = vpop.f32.mrb[0].mxu0
    %v721 = vadd.f32 0.0, %v720
    %v722 = vpop.f32.mrb[0].mxu0
    %723 = vmatprep.mubr.bf16.mxu0 0
    %724 = vmatmul.mubr.bf16.gmra.mrb[0].mxu0 %v424
    %v725 = vpop.f32.mrb[0].mxu0
    %v726 = vadd.f32 0.0, %v725
    %v727 = vpop.f32.mrb[0].mxu0
    %v728 = vpop.f32.mrb[0].mxu0
    %v729 = vadd.f32 0.0, %v728
    %v730 = vpop.f32.mrb[0].mxu0
    %731 = vmatprep.mubr.bf16.mxu0 0
    %732 = vmatmul.mubr.bf16.gmra.mrb[0].mxu0 %v427
    %v733 = vpop.f32.mrb[0].mxu0
    %v734 = vadd.f32 0.0, %v733
    %v735 = vpop.f32.mrb[0].mxu0
    %v736 = vpop.f32.mrb[0].mxu0
    %v737 = vadd.f32 0.0, %v736
    %v738 = vpop.f32.mrb[0].mxu0
    %739 = vmatprep.mubr.bf16.mxu0 0
    %740 = vmatmul.mubr.bf16.gmra.mrb[0].mxu0 %v430
    %v741 = vpop.f32.mrb[0].mxu0
    %v742 = vadd.f32 0.0, %v741
    %v743 = vpop.f32.mrb[0].mxu0
    %v744 = vpop.f32.mrb[0].mxu0
    %v745 = vadd.f32 0.0, %v744
    %v746 = vpop.f32.mrb[0].mxu0
    %747 = vmatprep.mubr.bf16.mxu0 0
    %748 = vmatmul.mubr.bf16.gmra.mrb[0].mxu0 %v433
    %v749 = vpop.f32.mrb[0].mxu0
    %v750 = vadd.f32 0.0, %v749
    %v751 = vpop.f32.mrb[0].mxu0
    %v752 = vpop.f32.mrb[0].mxu0
    %v753 = vadd.f32 0.0, %v752
    %v754 = vpop.f32.mrb[0].mxu0
    %755 = vdwg.mxu0
    %v756 = vpack.c.bf16 %v473, %v470
    %v757 = vpack.c.bf16 %v481, %v478
    %v758 = vpack.c.bf16 %v489, %v486
    %v759 = vpack.c.bf16 %v497, %v494
    %v760 = vpack.c.bf16 %v505, %v502
    %v761 = vpack.c.bf16 %v513, %v510
    %v762 = vpack.c.bf16 %v521, %v518
    %v763 = vpack.c.bf16 %v529, %v526
    %v764 = vpack.c.bf16 %v537, %v534
    %v765 = vpack.c.bf16 %v545, %v542
    %v766 = vpack.c.bf16 %v553, %v550
    %v767 = vpack.c.bf16 %v561, %v558
    %v768 = vpack.c.bf16 %v569, %v566
    %v769 = vpack.c.bf16 %v577, %v574
    %v770 = vpack.c.bf16 %v585, %v582
    %v771 = vpack.c.bf16 %v593, %v590
    %v772 = vpack.c.bf16 %v601, %v598
    %v773 = vpack.c.bf16 %v609, %v606
    %v774 = vpack.c.bf16 %v617, %v614
    %v775 = vpack.c.bf16 %v625, %v622
    %v776 = vpack.c.bf16 %v633, %v630
    %v777 = vpack.c.bf16 %v641, %v638
    %v778 = vpack.c.bf16 %v649, %v646
    %v779 = vpack.c.bf16 %v657, %v654
    %v780 = vpack.c.bf16 %v665, %v662
    %v781 = vpack.c.bf16 %v673, %v670
    %v782 = vpack.c.bf16 %v681, %v678
    %v783 = vpack.c.bf16 %v689, %v686
    %v784 = vpack.c.bf16 %v697, %v694
    %v785 = vpack.c.bf16 %v705, %v702
    %v786 = vpack.c.bf16 %v713, %v710
    %v787 = vpack.c.bf16 %v721, %v718
    %v788 = vpack.c.bf16 %v729, %v726
    %v789 = vpack.c.bf16 %v737, %v734
    %v790 = vpack.c.bf16 %v745, %v742
    %v791 = vpack.c.bf16 %v753, %v750
    %v792 = vld [vmem:[%s1] sm:$0xf]
    %v793 = vld [vmem:[%s1 + $0x4] sm:$0xf]
    %v794 = vld [vmem:[%s1 + $0x8] sm:$0xf]
    %v795 = vld [vmem:[%s1 + $0xc] sm:$0xf]
    %v796 = vld [vmem:[%s1 + $0x10] sm:$0xf]
    %v797 = vld [vmem:[%s1 + $0x14] sm:$0xf]
    %v798 = vld [vmem:[%s1 + $0x18] sm:$0xf]
    %v799 = vld [vmem:[%s1 + $0x1c] sm:$0xf]
    %v808 = vunpack.c.l.b16 %v792
    %v809 = vunpack.c.l.b16 %v793
    %v810 = vunpack.c.l.b16 %v794
    %v811 = vunpack.c.l.b16 %v795
    %v812 = vunpack.c.l.b16 %v796
    %v813 = vunpack.c.l.b16 %v797
    %v814 = vunpack.c.l.b16 %v798
    %v815 = vunpack.c.l.b16 %v799
    %v816 = vpack.c.b16 %v809, %v808
    %v817 = vpack.c.b16 %v811, %v810
    %v818 = vpack.c.b16 %v813, %v812
    %v819 = vpack.c.b16 %v815, %v814
    %vm820 = vcmask 785408
    %v822 = vsel %vm820, %v816, 0
    %v825 = vsel %vm820, %v817, 0
    %v828 = vsel %vm820, %v818, 0
    %v831 = vsel %vm820, %v819, 0
    %833 = vmatprep.subr.bf16.mxu0 0
    %834 = vmatpush1.bf16.msra.mxu0 %v756
    %835 = vmatprep.subr.bf16.mxu0 0
    %836 = vmatpush1.bf16.msra.mxu0 %v757
    %837 = vmatprep.subr.bf16.mxu0 0
    %838 = vmatpush1.bf16.msra.mxu0 %v758
    %839 = vmatprep.subr.bf16.mxu0 0
    %840 = vmatpush1.bf16.msra.mxu0 %v759
    %841 = vmatprep.subr.bf16.mxu0 0
    %842 = vmatpush1.bf16.msra.mxu0 %v760
    %843 = vmatprep.subr.bf16.mxu0 0
    %844 = vmatpush1.bf16.msra.mxu0 %v761
    %845 = vmatprep.subr.bf16.mxu0 0
    %846 = vmatpush1.bf16.msra.mxu0 0
    %847 = vmatprep.subr.bf16.mxu0 0
    %848 = vmatpush1.bf16.msra.mxu0 0
    %849 = vmatprep.subr.bf16.mxu0 0
    %850 = vmatpush1.bf16.msra.mxu0 0
    %851 = vmatprep.subr.bf16.mxu0 0
    %852 = vmatpush1.bf16.msra.mxu0 0
    %853 = vmatprep.subr.bf16.mxu0 0
    %854 = vmatpush1.bf16.msra.mxu0 0
    %855 = vmatprep.subr.bf16.mxu0 0
    %856 = vmatpush1.bf16.msra.mxu0 0
    %857 = vmatprep.subr.bf16.mxu0 0
    %858 = vmatpush1.bf16.msra.mxu0 0
    %859 = vmatprep.subr.bf16.mxu0 0
    %860 = vmatpush1.bf16.msra.mxu0 0
    %861 = vmatprep.subr.bf16.mxu0 0
    %862 = vmatpush1.bf16.msra.mxu0 0
    %863 = vmatprep.subr.bf16.mxu0 0
    %864 = vmatpush1.bf16.msra.mxu0 0
    %865 = vmatprep.mubr.bf16.mxu0 0
    %866 = vmatmul.mubr.bf16.gmra.mrb[0].mxu0 %v822
    %v867 = vpop.f32.mrb[0].mxu0
    %v868 = vadd.f32 0.0, %v867
    %v869 = vpop.f32.mrb[0].mxu0
    %v870 = vpop.f32.mrb[0].mxu0
    %v871 = vadd.f32 0.0, %v870
    %v872 = vpop.f32.mrb[0].mxu0
    %873 = vmatprep.mubr.bf16.mxu0 0
    %874 = vmatmul.mubr.bf16.gmra.mrb[0].mxu0 %v825
    %v875 = vpop.f32.mrb[0].mxu0
    %v876 = vadd.f32 0.0, %v875
    %v877 = vpop.f32.mrb[0].mxu0
    %v878 = vpop.f32.mrb[0].mxu0
    %v879 = vadd.f32 0.0, %v878
    %v880 = vpop.f32.mrb[0].mxu0
    %881 = vmatprep.mubr.bf16.mxu0 0
    %882 = vmatmul.mubr.bf16.gmra.mrb[0].mxu0 %v828
    %v883 = vpop.f32.mrb[0].mxu0
    %v884 = vadd.f32 0.0, %v883
    %v885 = vpop.f32.mrb[0].mxu0
    %v886 = vpop.f32.mrb[0].mxu0
    %v887 = vadd.f32 0.0, %v886
    %v888 = vpop.f32.mrb[0].mxu0
    %889 = vmatprep.mubr.bf16.mxu0 0
    %890 = vmatmul.mubr.bf16.gmra.mrb[0].mxu0 %v831
    %v891 = vpop.f32.mrb[0].mxu0
    %v892 = vadd.f32 0.0, %v891
    %v893 = vpop.f32.mrb[0].mxu0
    %v894 = vpop.f32.mrb[0].mxu0
    %v895 = vadd.f32 0.0, %v894
    %v896 = vpop.f32.mrb[0].mxu0
    %897 = vdwg.mxu0
    %vm898 = vcmask 523264
    %899 = vst.msk [vmem:[#allocation2] sm:$0xff] %vm898, %v868
    %900 = vst.msk [vmem:[#allocation2 + $0x8] sm:$0xff] %vm898, %v871
    %901 = vst.msk [vmem:[#allocation2 + $0x10] sm:$0xff] %vm898, %v876
    %902 = vst.msk [vmem:[#allocation2 + $0x18] sm:$0xff] %vm898, %v879
    %903 = vst.msk [vmem:[#allocation2 + $0x20] sm:$0xff] %vm898, %v884
    %904 = vst.msk [vmem:[#allocation2 + $0x28] sm:$0xff] %vm898, %v887
    %905 = vst.msk [vmem:[#allocation2 + $0x30] sm:$0xff] %vm898, %v892
    %906 = vst.msk [vmem:[#allocation2 + $0x38] sm:$0xff] %vm898, %v895
    %907 = vmatprep.subr.bf16.mxu0 0
    %908 = vmatpush1.bf16.msra.mxu0 %v762
    %909 = vmatprep.subr.bf16.mxu0 0
    %910 = vmatpush1.bf16.msra.mxu0 %v763
    %911 = vmatprep.subr.bf16.mxu0 0
    %912 = vmatpush1.bf16.msra.mxu0 %v764
    %913 = vmatprep.subr.bf16.mxu0 0
    %914 = vmatpush1.bf16.msra.mxu0 %v765
    %915 = vmatprep.subr.bf16.mxu0 0
    %916 = vmatpush1.bf16.msra.mxu0 %v766
    %917 = vmatprep.subr.bf16.mxu0 0
    %918 = vmatpush1.bf16.msra.mxu0 %v767
    %919 = vmatprep.subr.bf16.mxu0 0
    %920 = vmatpush1.bf16.msra.mxu0 0
    %921 = vmatprep.subr.bf16.mxu0 0
    %922 = vmatpush1.bf16.msra.mxu0 0
    %923 = vmatprep.subr.bf16.mxu0 0
    %924 = vmatpush1.bf16.msra.mxu0 0
    %925 = vmatprep.subr.bf16.mxu0 0
    %926 = vmatpush1.bf16.msra.mxu0 0
    %927 = vmatprep.subr.bf16.mxu0 0
    %928 = vmatpush1.bf16.msra.mxu0 0
    %929 = vmatprep.subr.bf16.mxu0 0
    %930 = vmatpush1.bf16.msra.mxu0 0
    %931 = vmatprep.subr.bf16.mxu0 0
    %932 = vmatpush1.bf16.msra.mxu0 0
    %933 = vmatprep.subr.bf16.mxu0 0
    %934 = vmatpush1.bf16.msra.mxu0 0
    %935 = vmatprep.subr.bf16.mxu0 0
    %936 = vmatpush1.bf16.msra.mxu0 0
    %937 = vmatprep.subr.bf16.mxu0 0
    %938 = vmatpush1.bf16.msra.mxu0 0
    %939 = vmatprep.mubr.bf16.mxu0 0
    %940 = vmatmul.mubr.bf16.gmra.mrb[0].mxu0 %v822
    %v941 = vpop.f32.mrb[0].mxu0
    %v942 = vadd.f32 0.0, %v941
    %v943 = vpop.f32.mrb[0].mxu0
    %v944 = vpop.f32.mrb[0].mxu0
    %v945 = vadd.f32 0.0, %v944
    %v946 = vpop.f32.mrb[0].mxu0
    %947 = vmatprep.mubr.bf16.mxu0 0
    %948 = vmatmul.mubr.bf16.gmra.mrb[0].mxu0 %v825
    %v949 = vpop.f32.mrb[0].mxu0
    %v950 = vadd.f32 0.0, %v949
    %v951 = vpop.f32.mrb[0].mxu0
    %v952 = vpop.f32.mrb[0].mxu0
    %v953 = vadd.f32 0.0, %v952
    %v954 = vpop.f32.mrb[0].mxu0
    %955 = vmatprep.mubr.bf16.mxu0 0
    %956 = vmatmul.mubr.bf16.gmra.mrb[0].mxu0 %v828
    %v957 = vpop.f32.mrb[0].mxu0
    %v958 = vadd.f32 0.0, %v957
    %v959 = vpop.f32.mrb[0].mxu0
    %v960 = vpop.f32.mrb[0].mxu0
    %v961 = vadd.f32 0.0, %v960
    %v962 = vpop.f32.mrb[0].mxu0
    %963 = vmatprep.mubr.bf16.mxu0 0
    %964 = vmatmul.mubr.bf16.gmra.mrb[0].mxu0 %v831
    %v965 = vpop.f32.mrb[0].mxu0
    %v966 = vadd.f32 0.0, %v965
    %v967 = vpop.f32.mrb[0].mxu0
    %v968 = vpop.f32.mrb[0].mxu0
    %v969 = vadd.f32 0.0, %v968
    %v970 = vpop.f32.mrb[0].mxu0
    %971 = vdwg.mxu0
    %s972 = scalar_lea.vmem [#allocation2], 64
    %973 = vst.msk [vmem:[%s972] sm:$0xff] %vm898, %v942
    %974 = vst.msk [vmem:[%s972 + $0x8] sm:$0xff] %vm898, %v945
    %975 = vst.msk [vmem:[%s972 + $0x10] sm:$0xff] %vm898, %v950
    %976 = vst.msk [vmem:[%s972 + $0x18] sm:$0xff] %vm898, %v953
    %977 = vst.msk [vmem:[%s972 + $0x20] sm:$0xff] %vm898, %v958
    %978 = vst.msk [vmem:[%s972 + $0x28] sm:$0xff] %vm898, %v961
    %979 = vst.msk [vmem:[%s972 + $0x30] sm:$0xff] %vm898, %v966
    %980 = vst.msk [vmem:[%s972 + $0x38] sm:$0xff] %vm898, %v969
    %981 = vmatprep.subr.bf16.mxu0 0
    %982 = vmatpush1.bf16.msra.mxu0 %v768
    %983 = vmatprep.subr.bf16.mxu0 0
    %984 = vmatpush1.bf16.msra.mxu0 %v769
    %985 = vmatprep.subr.bf16.mxu0 0
    %986 = vmatpush1.bf16.msra.mxu0 %v770
    %987 = vmatprep.subr.bf16.mxu0 0
    %988 = vmatpush1.bf16.msra.mxu0 %v771
    %989 = vmatprep.subr.bf16.mxu0 0
    %990 = vmatpush1.bf16.msra.mxu0 %v772
    %991 = vmatprep.subr.bf16.mxu0 0
    %992 = vmatpush1.bf16.msra.mxu0 %v773
    %993 = vmatprep.subr.bf16.mxu0 0
    %994 = vmatpush1.bf16.msra.mxu0 0
    %995 = vmatprep.subr.bf16.mxu0 0
    %996 = vmatpush1.bf16.msra.mxu0 0
    %997 = vmatprep.subr.bf16.mxu0 0
    %998 = vmatpush1.bf16.msra.mxu0 0
    %999 = vmatprep.subr.bf16.mxu0 0
    %1000 = vmatpush1.bf16.msra.mxu0 0
    %1001 = vmatprep.subr.bf16.mxu0 0
    %1002 = vmatpush1.bf16.msra.mxu0 0
    %1003 = vmatprep.subr.bf16.mxu0 0
    %1004 = vmatpush1.bf16.msra.mxu0 0
    %1005 = vmatprep.subr.bf16.mxu0 0
    %1006 = vmatpush1.bf16.msra.mxu0 0
    %1007 = vmatprep.subr.bf16.mxu0 0
    %1008 = vmatpush1.bf16.msra.mxu0 0
    %1009 = vmatprep.subr.bf16.mxu0 0
    %1010 = vmatpush1.bf16.msra.mxu0 0
    %1011 = vmatprep.subr.bf16.mxu0 0
    %1012 = vmatpush1.bf16.msra.mxu0 0
    %1013 = vmatprep.mubr.bf16.mxu0 0
    %1014 = vmatmul.mubr.bf16.gmra.mrb[0].mxu0 %v822
    %v1015 = vpop.f32.mrb[0].mxu0
    %v1016 = vadd.f32 0.0, %v1015
    %v1017 = vpop.f32.mrb[0].mxu0
    %v1018 = vpop.f32.mrb[0].mxu0
    %v1019 = vadd.f32 0.0, %v1018
    %v1020 = vpop.f32.mrb[0].mxu0
    %1021 = vmatprep.mubr.bf16.mxu0 0
    %1022 = vmatmul.mubr.bf16.gmra.mrb[0].mxu0 %v825
    %v1023 = vpop.f32.mrb[0].mxu0
    %v1024 = vadd.f32 0.0, %v1023
    %v1025 = vpop.f32.mrb[0].mxu0
    %v1026 = vpop.f32.mrb[0].mxu0
    %v1027 = vadd.f32 0.0, %v1026
    %v1028 = vpop.f32.mrb[0].mxu0
    %1029 = vmatprep.mubr.bf16.mxu0 0
    %1030 = vmatmul.mubr.bf16.gmra.mrb[0].mxu0 %v828
    %v1031 = vpop.f32.mrb[0].mxu0
    %v1032 = vadd.f32 0.0, %v1031
    %v1033 = vpop.f32.mrb[0].mxu0
    %v1034 = vpop.f32.mrb[0].mxu0
    %v1035 = vadd.f32 0.0, %v1034
    %v1036 = vpop.f32.mrb[0].mxu0
    %1037 = vmatprep.mubr.bf16.mxu0 0
    %1038 = vmatmul.mubr.bf16.gmra.mrb[0].mxu0 %v831
    %v1039 = vpop.f32.mrb[0].mxu0
    %v1040 = vadd.f32 0.0, %v1039
    %v1041 = vpop.f32.mrb[0].mxu0
    %v1042 = vpop.f32.mrb[0].mxu0
    %v1043 = vadd.f32 0.0, %v1042
    %v1044 = vpop.f32.mrb[0].mxu0
    %1045 = vdwg.mxu0
    %s1046 = scalar_lea.vmem [#allocation2], 128
    %1047 = vst.msk [vmem:[%s1046] sm:$0xff] %vm898, %v1016
    %1048 = vst.msk [vmem:[%s1046 + $0x8] sm:$0xff] %vm898, %v1019
    %1049 = vst.msk [vmem:[%s1046 + $0x10] sm:$0xff] %vm898, %v1024
    %1050 = vst.msk [vmem:[%s1046 + $0x18] sm:$0xff] %vm898, %v1027
    %1051 = vst.msk [vmem:[%s1046 + $0x20] sm:$0xff] %vm898, %v1032
    %1052 = vst.msk [vmem:[%s1046 + $0x28] sm:$0xff] %vm898, %v1035
    %1053 = vst.msk [vmem:[%s1046 + $0x30] sm:$0xff] %vm898, %v1040
    %1054 = vst.msk [vmem:[%s1046 + $0x38] sm:$0xff] %vm898, %v1043
    %1055 = vmatprep.subr.bf16.mxu0 0
    %1056 = vmatpush1.bf16.msra.mxu0 %v774
    %1057 = vmatprep.subr.bf16.mxu0 0
    %1058 = vmatpush1.bf16.msra.mxu0 %v775
    %1059 = vmatprep.subr.bf16.mxu0 0
    %1060 = vmatpush1.bf16.msra.mxu0 %v776
    %1061 = vmatprep.subr.bf16.mxu0 0
    %1062 = vmatpush1.bf16.msra.mxu0 %v777
    %1063 = vmatprep.subr.bf16.mxu0 0
    %1064 = vmatpush1.bf16.msra.mxu0 %v778
    %1065 = vmatprep.subr.bf16.mxu0 0
    %1066 = vmatpush1.bf16.msra.mxu0 %v779
    %1067 = vmatprep.subr.bf16.mxu0 0
    %1068 = vmatpush1.bf16.msra.mxu0 0
    %1069 = vmatprep.subr.bf16.mxu0 0
    %1070 = vmatpush1.bf16.msra.mxu0 0
    %1071 = vmatprep.subr.bf16.mxu0 0
    %1072 = vmatpush1.bf16.msra.mxu0 0
    %1073 = vmatprep.subr.bf16.mxu0 0
    %1074 = vmatpush1.bf16.msra.mxu0 0
    %1075 = vmatprep.subr.bf16.mxu0 0
    %1076 = vmatpush1.bf16.msra.mxu0 0
    %1077 = vmatprep.subr.bf16.mxu0 0
    %1078 = vmatpush1.bf16.msra.mxu0 0
    %1079 = vmatprep.subr.bf16.mxu0 0
    %1080 = vmatpush1.bf16.msra.mxu0 0
    %1081 = vmatprep.subr.bf16.mxu0 0
    %1082 = vmatpush1.bf16.msra.mxu0 0
    %1083 = vmatprep.subr.bf16.mxu0 0
    %1084 = vmatpush1.bf16.msra.mxu0 0
    %1085 = vmatprep.subr.bf16.mxu0 0
    %1086 = vmatpush1.bf16.msra.mxu0 0
    %1087 = vmatprep.mubr.bf16.mxu0 0
    %1088 = vmatmul.mubr.bf16.gmra.mrb[0].mxu0 %v822
    %v1089 = vpop.f32.mrb[0].mxu0
    %v1090 = vadd.f32 0.0, %v1089
    %v1091 = vpop.f32.mrb[0].mxu0
    %v1092 = vpop.f32.mrb[0].mxu0
    %v1093 = vadd.f32 0.0, %v1092
    %v1094 = vpop.f32.mrb[0].mxu0
    %1095 = vmatprep.mubr.bf16.mxu0 0
    %1096 = vmatmul.mubr.bf16.gmra.mrb[0].mxu0 %v825
    %v1097 = vpop.f32.mrb[0].mxu0
    %v1098 = vadd.f32 0.0, %v1097
    %v1099 = vpop.f32.mrb[0].mxu0
    %v1100 = vpop.f32.mrb[0].mxu0
    %v1101 = vadd.f32 0.0, %v1100
    %v1102 = vpop.f32.mrb[0].mxu0
    %1103 = vmatprep.mubr.bf16.mxu0 0
    %1104 = vmatmul.mubr.bf16.gmra.mrb[0].mxu0 %v828
    %v1105 = vpop.f32.mrb[0].mxu0
    %v1106 = vadd.f32 0.0, %v1105
    %v1107 = vpop.f32.mrb[0].mxu0
    %v1108 = vpop.f32.mrb[0].mxu0
    %v1109 = vadd.f32 0.0, %v1108
    %v1110 = vpop.f32.mrb[0].mxu0
    %1111 = vmatprep.mubr.bf16.mxu0 0
    %1112 = vmatmul.mubr.bf16.gmra.mrb[0].mxu0 %v831
    %v1113 = vpop.f32.mrb[0].mxu0
    %v1114 = vadd.f32 0.0, %v1113
    %v1115 = vpop.f32.mrb[0].mxu0
    %v1116 = vpop.f32.mrb[0].mxu0
    %v1117 = vadd.f32 0.0, %v1116
    %v1118 = vpop.f32.mrb[0].mxu0
    %1119 = vdwg.mxu0
    %s1120 = scalar_lea.vmem [#allocation2], 192
    %1121 = vst.msk [vmem:[%s1120] sm:$0xff] %vm898, %v1090
    %1122 = vst.msk [vmem:[%s1120 + $0x8] sm:$0xff] %vm898, %v1093
    %1123 = vst.msk [vmem:[%s1120 + $0x10] sm:$0xff] %vm898, %v1098
    %1124 = vst.msk [vmem:[%s1120 + $0x18] sm:$0xff] %vm898, %v1101
    %1125 = vst.msk [vmem:[%s1120 + $0x20] sm:$0xff] %vm898, %v1106
    %1126 = vst.msk [vmem:[%s1120 + $0x28] sm:$0xff] %vm898, %v1109
    %1127 = vst.msk [vmem:[%s1120 + $0x30] sm:$0xff] %vm898, %v1114
    %1128 = vst.msk [vmem:[%s1120 + $0x38] sm:$0xff] %vm898, %v1117
    %1129 = vmatprep.subr.bf16.mxu0 0
    %1130 = vmatpush1.bf16.msra.mxu0 %v780
    %1131 = vmatprep.subr.bf16.mxu0 0
    %1132 = vmatpush1.bf16.msra.mxu0 %v781
    %1133 = vmatprep.subr.bf16.mxu0 0
    %1134 = vmatpush1.bf16.msra.mxu0 %v782
    %1135 = vmatprep.subr.bf16.mxu0 0
    %1136 = vmatpush1.bf16.msra.mxu0 %v783
    %1137 = vmatprep.subr.bf16.mxu0 0
    %1138 = vmatpush1.bf16.msra.mxu0 %v784
    %1139 = vmatprep.subr.bf16.mxu0 0
    %1140 = vmatpush1.bf16.msra.mxu0 %v785
    %1141 = vmatprep.subr.bf16.mxu0 0
    %1142 = vmatpush1.bf16.msra.mxu0 0
    %1143 = vmatprep.subr.bf16.mxu0 0
    %1144 = vmatpush1.bf16.msra.mxu0 0
    %1145 = vmatprep.subr.bf16.mxu0 0
    %1146 = vmatpush1.bf16.msra.mxu0 0
    %1147 = vmatprep.subr.bf16.mxu0 0
    %1148 = vmatpush1.bf16.msra.mxu0 0
    %1149 = vmatprep.subr.bf16.mxu0 0
    %1150 = vmatpush1.bf16.msra.mxu0 0
    %1151 = vmatprep.subr.bf16.mxu0 0
    %1152 = vmatpush1.bf16.msra.mxu0 0
    %1153 = vmatprep.subr.bf16.mxu0 0
    %1154 = vmatpush1.bf16.msra.mxu0 0
    %1155 = vmatprep.subr.bf16.mxu0 0
    %1156 = vmatpush1.bf16.msra.mxu0 0
    %1157 = vmatprep.subr.bf16.mxu0 0
    %1158 = vmatpush1.bf16.msra.mxu0 0
    %1159 = vmatprep.subr.bf16.mxu0 0
    %1160 = vmatpush1.bf16.msra.mxu0 0
    %1161 = vmatprep.mubr.bf16.mxu0 0
    %1162 = vmatmul.mubr.bf16.gmra.mrb[0].mxu0 %v822
    %v1163 = vpop.f32.mrb[0].mxu0
    %v1164 = vadd.f32 0.0, %v1163
    %v1165 = vpop.f32.mrb[0].mxu0
    %v1166 = vpop.f32.mrb[0].mxu0
    %v1167 = vadd.f32 0.0, %v1166
    %v1168 = vpop.f32.mrb[0].mxu0
    %1169 = vmatprep.mubr.bf16.mxu0 0
    %1170 = vmatmul.mubr.bf16.gmra.mrb[0].mxu0 %v825
    %v1171 = vpop.f32.mrb[0].mxu0
    %v1172 = vadd.f32 0.0, %v1171
    %v1173 = vpop.f32.mrb[0].mxu0
    %v1174 = vpop.f32.mrb[0].mxu0
    %v1175 = vadd.f32 0.0, %v1174
    %v1176 = vpop.f32.mrb[0].mxu0
    %1177 = vmatprep.mubr.bf16.mxu0 0
    %1178 = vmatmul.mubr.bf16.gmra.mrb[0].mxu0 %v828
    %v1179 = vpop.f32.mrb[0].mxu0
    %v1180 = vadd.f32 0.0, %v1179
    %v1181 = vpop.f32.mrb[0].mxu0
    %v1182 = vpop.f32.mrb[0].mxu0
    %v1183 = vadd.f32 0.0, %v1182
    %v1184 = vpop.f32.mrb[0].mxu0
    %1185 = vmatprep.mubr.bf16.mxu0 0
    %1186 = vmatmul.mubr.bf16.gmra.mrb[0].mxu0 %v831
    %v1187 = vpop.f32.mrb[0].mxu0
    %v1188 = vadd.f32 0.0, %v1187
    %v1189 = vpop.f32.mrb[0].mxu0
    %v1190 = vpop.f32.mrb[0].mxu0
    %v1191 = vadd.f32 0.0, %v1190
    %v1192 = vpop.f32.mrb[0].mxu0
    %1193 = vdwg.mxu0
    %s1194 = scalar_lea.vmem [#allocation2], 256
    %1195 = vst.msk [vmem:[%s1194] sm:$0xff] %vm898, %v1164
    %1196 = vst.msk [vmem:[%s1194 + $0x8] sm:$0xff] %vm898, %v1167
    %1197 = vst.msk [vmem:[%s1194 + $0x10] sm:$0xff] %vm898, %v1172
    %1198 = vst.msk [vmem:[%s1194 + $0x18] sm:$0xff] %vm898, %v1175
    %1199 = vst.msk [vmem:[%s1194 + $0x20] sm:$0xff] %vm898, %v1180
    %1200 = vst.msk [vmem:[%s1194 + $0x28] sm:$0xff] %vm898, %v1183
    %1201 = vst.msk [vmem:[%s1194 + $0x30] sm:$0xff] %vm898, %v1188
    %1202 = vst.msk [vmem:[%s1194 + $0x38] sm:$0xff] %vm898, %v1191
    %1203 = vmatprep.subr.bf16.mxu0 0
    %1204 = vmatpush1.bf16.msra.mxu0 %v786
    %1205 = vmatprep.subr.bf16.mxu0 0
    %1206 = vmatpush1.bf16.msra.mxu0 %v787
    %1207 = vmatprep.subr.bf16.mxu0 0
    %1208 = vmatpush1.bf16.msra.mxu0 %v788
    %1209 = vmatprep.subr.bf16.mxu0 0
    %1210 = vmatpush1.bf16.msra.mxu0 %v789
    %1211 = vmatprep.subr.bf16.mxu0 0
    %1212 = vmatpush1.bf16.msra.mxu0 %v790
    %1213 = vmatprep.subr.bf16.mxu0 0
    %1214 = vmatpush1.bf16.msra.mxu0 %v791
    %1215 = vmatprep.subr.bf16.mxu0 0
    %1216 = vmatpush1.bf16.msra.mxu0 0
    %1217 = vmatprep.subr.bf16.mxu0 0
    %1218 = vmatpush1.bf16.msra.mxu0 0
    %1219 = vmatprep.subr.bf16.mxu0 0
    %1220 = vmatpush1.bf16.msra.mxu0 0
    %1221 = vmatprep.subr.bf16.mxu0 0
    %1222 = vmatpush1.bf16.msra.mxu0 0
    %1223 = vmatprep.subr.bf16.mxu0 0
    %1224 = vmatpush1.bf16.msra.mxu0 0
    %1225 = vmatprep.subr.bf16.mxu0 0
    %1226 = vmatpush1.bf16.msra.mxu0 0
    %1227 = vmatprep.subr.bf16.mxu0 0
    %1228 = vmatpush1.bf16.msra.mxu0 0
    %1229 = vmatprep.subr.bf16.mxu0 0
    %1230 = vmatpush1.bf16.msra.mxu0 0
    %1231 = vmatprep.subr.bf16.mxu0 0
    %1232 = vmatpush1.bf16.msra.mxu0 0
    %1233 = vmatprep.subr.bf16.mxu0 0
    %1234 = vmatpush1.bf16.msra.mxu0 0
    %1235 = vmatprep.mubr.bf16.mxu0 0
    %1236 = vmatmul.mubr.bf16.gmra.mrb[0].mxu0 %v822
    %v1237 = vpop.f32.mrb[0].mxu0
    %v1238 = vadd.f32 0.0, %v1237
    %v1239 = vpop.f32.mrb[0].mxu0
    %v1240 = vpop.f32.mrb[0].mxu0
    %v1241 = vadd.f32 0.0, %v1240
    %v1242 = vpop.f32.mrb[0].mxu0
    %1243 = vmatprep.mubr.bf16.mxu0 0
    %1244 = vmatmul.mubr.bf16.gmra.mrb[0].mxu0 %v825
    %v1245 = vpop.f32.mrb[0].mxu0
    %v1246 = vadd.f32 0.0, %v1245
    %v1247 = vpop.f32.mrb[0].mxu0
    %v1248 = vpop.f32.mrb[0].mxu0
    %v1249 = vadd.f32 0.0, %v1248
    %v1250 = vpop.f32.mrb[0].mxu0
    %1251 = vmatprep.mubr.bf16.mxu0 0
    %1252 = vmatmul.mubr.bf16.gmra.mrb[0].mxu0 %v828
    %v1253 = vpop.f32.mrb[0].mxu0
    %v1254 = vadd.f32 0.0, %v1253
    %v1255 = vpop.f32.mrb[0].mxu0
    %v1256 = vpop.f32.mrb[0].mxu0
    %v1257 = vadd.f32 0.0, %v1256
    %v1258 = vpop.f32.mrb[0].mxu0
    %1259 = vmatprep.mubr.bf16.mxu0 0
    %1260 = vmatmul.mubr.bf16.gmra.mrb[0].mxu0 %v831
    %v1261 = vpop.f32.mrb[0].mxu0
    %v1262 = vadd.f32 0.0, %v1261
    %v1263 = vpop.f32.mrb[0].mxu0
    %v1264 = vpop.f32.mrb[0].mxu0
    %v1265 = vadd.f32 0.0, %v1264
    %v1266 = vpop.f32.mrb[0].mxu0
    %1267 = vdwg.mxu0
    %s1268 = scalar_lea.vmem [#allocation2], 320
    %1269 = vst.msk [vmem:[%s1268] sm:$0xff] %vm898, %v1238
    %1270 = vst.msk [vmem:[%s1268 + $0x8] sm:$0xff] %vm898, %v1241
    %1271 = vst.msk [vmem:[%s1268 + $0x10] sm:$0xff] %vm898, %v1246
    %1272 = vst.msk [vmem:[%s1268 + $0x18] sm:$0xff] %vm898, %v1249
    %1273 = vst.msk [vmem:[%s1268 + $0x20] sm:$0xff] %vm898, %v1254
    %1274 = vst.msk [vmem:[%s1268 + $0x28] sm:$0xff] %vm898, %v1257
    %1275 = vst.msk [vmem:[%s1268 + $0x30] sm:$0xff] %vm898, %v1262
    %1276 = vst.msk [vmem:[%s1268 + $0x38] sm:$0xff] %vm898, %v1265
    // Predicated region
    $region14: #{tpu_custom_call.1} parent=1 // pred_check
      _
    $region15: #{tpu_custom_call.1} parent=1 // pred_check_branch
      %1278 = sbr.rel (0) target = $region17
    $region16: #{tpu_custom_call.1} parent=1 // pred_region
      %s1280 = ssub.s32 6144, 6144
      %1281 = vsyncadd [#allocation3], %s1280
      %s1282 = sshll.u32 [#allocation2], 4
      %s1283 = int_to_ptr.vmem [resolvable:$true] %s1282
      %1288 = dma.vmem_to_hbm [thread:$0]  %s1283, 6144, %s3, [#allocation3], 128, 128, 8
    $region17: #{tpu_custom_call.1} parent=1 // pred_fallthru
      _
    // Predicated region
    $region18: #{tpu_custom_call.1} parent=1 // pred_check
      _
    $region19: #{tpu_custom_call.1} parent=1 // pred_check_branch
      %1290 = sbr.rel (0) target = $region21
    $region20: #{tpu_custom_call.1} parent=1 // pred_region
      %1291 = dma.done [#allocation3], 6144
    $region21: #{tpu_custom_call.1} parent=1 // pred_fallthru
      _
    %1292 = vsyncpa [#allocation3], 1

</llo_original>
